<compile_context>
chip_gen: v7x
topology: tpu7x:2x2x1
jax: 0.10.0
libtpu: 0.0.40
codegen_flags: <defaults>
</compile_context>

<pallas_src>
import jax
import jax.numpy as jnp
from jax.experimental import pallas as pl
from jax.experimental.pallas import tpu as pltpu


def _head_transform_kernel(eps):
    def kernel(x_ref, w_ref, p_ref, o_ref):
        # Dense: y = x @ W  (MXU, f32 accumulation; operands kept in native dtype).
        y = jnp.dot(x_ref[...], w_ref[...], preferred_element_type=jnp.float32)

        # Packed params: row 0 = bias, row 1 = gamma, row 2 = beta.  (1, H)
        # slices keep broadcasts on the natural sublane/lane layout.
        p = p_ref[...].astype(jnp.float32)
        b, g, beta = p[0:1, :], p[1:2, :], p[2:3, :]

        # Bias + ReLU (module uses nn.ReLU as transform_act_fn).
        y = jnp.maximum(y + b, 0.0)

        # LayerNorm over the hidden (last) axis, biased variance like PyTorch.
        # One-pass statistics: two cross-lane reductions (sum, sum of squares).
        h = y.shape[-1]
        inv_h = jnp.float32(1.0 / h)
        s1 = jnp.sum(y, axis=-1, keepdims=True)
        s2 = jnp.sum(y * y, axis=-1, keepdims=True)
        mean = s1 * inv_h
        # E[y^2] - E[y]^2 can cancel to a tiny negative in f32 -> clamp so
        # rsqrt(var + eps) never sees a negative (NaN).
        var = jnp.maximum(s2 * inv_h - mean * mean, 0.0)
        # (tm, 1) rsqrt -> EUP slot (effectively free).
        scale = jax.lax.rsqrt(var + jnp.float32(eps))

        o_ref[...] = ((y - mean) * scale * g + beta).astype(o_ref.dtype)

    return kernel


def _vmem_capacity_bytes():
    """Physical VMEM of the local chip; conservative fallback = 64 MiB (v7x)."""
    try:
        return int(pltpu.get_tpu_info().vmem_capacity_bytes)
    except Exception:
        return 64 * 1024 * 1024


def _round_up(x, m):
    return ((x + m - 1) // m) * m


def _choose_tiling(M, H, x_itemsize, w_itemsize, vmem_cap, row_cap=2048):
    """Pick (tm, num_steps) such that:
      - the parallel grid has an even number (>= 2) of steps (v7x TC balance),
      - double-buffered x/out tiles + resident weight/params fit ~40% of VMEM,
      - tm is a multiple of 8 (sublane constraint) and <= row_cap."""
    resident = H * H * w_itemsize + 3 * H * 4      # single-buffered weight + params
    per_row = 4 * H * x_itemsize                   # x + out tiles, double-buffered
    budget = int(0.4 * vmem_cap)
    vmem_rows = max(8, ((budget - resident) // per_row // 8) * 8)
    cap = max(8, min(row_cap, vmem_rows))

    num_steps = max(2, pl.cdiv(M, cap))
    if num_steps % 2:
        num_steps += 1                             # even step count -> both TCs busy
    tm = min(cap, _round_up(pl.cdiv(M, num_steps), 8))
    return tm, num_steps


def bert_prediction_head_transform(x, weight, bias, gamma, beta, *, eps=1e-12, tm=None):
    """x: (batch, seq, hidden). weight: (hidden_in, hidden_out). Returns x.shape."""
    B, S, H = x.shape
    M = B * S
    x2 = x.reshape(M, H)

    x_itemsize = jnp.dtype(x.dtype).itemsize
    w_itemsize = jnp.dtype(weight.dtype).itemsize
    vmem_cap = _vmem_capacity_bytes()

    if tm is None:
        tm, num_steps = _choose_tiling(M, H, x_itemsize, w_itemsize, vmem_cap)
    else:
        tm = max(8, _round_up(tm, 8))
        num_steps = max(2, pl.cdiv(M, tm))
        if num_steps % 2:
            num_steps += 1

    # Pad rows to an integral (even) number of tm-row steps; slice back at the end.
    m_pad = num_steps * tm
    if m_pad != M:
        x2 = jnp.pad(x2, ((0, m_pad - M), (0, 0)))

    # Pack bias / gamma / beta into one (3, H) slab -> one DMA, one VMEM buffer.
    params = jnp.stack(
        [bias.reshape(H), gamma.reshape(H), beta.reshape(H)], axis=0
    ).astype(jnp.float32)

    # Explicit, generation-aware VMEM budget: double-buffered x/out tiles +
    # single-buffered resident weight/params, 2x headroom, <= 75% of physical VMEM.
    footprint = 4 * tm * H * x_itemsize + H * H * w_itemsize + 3 * H * 4
    vmem_limit = int(min(max(2 * footprint, 4 * 1024 * 1024), (3 * vmem_cap) // 4))

    cost = pl.CostEstimate(
        flops=2 * m_pad * H * H + 10 * m_pad * H,
        transcendentals=m_pad,                      # one rsqrt per row
        bytes_accessed=2 * m_pad * H * x_itemsize + H * H * w_itemsize + 3 * H * 4,
    )

    out = pl.pallas_call(
        _head_transform_kernel(eps),
        out_shape=jax.ShapeDtypeStruct((m_pad, H), x.dtype),
        grid_spec=pltpu.PrefetchScalarGridSpec(
            num_scalar_prefetch=0,
            grid=(num_steps,),
            in_specs=[
                pl.BlockSpec((tm, H), lambda i: (i, 0)),          # x rows tile
                pl.BlockSpec((H, H), lambda i: (0, 0),            # resident weight
                             pipeline_mode=pl.Buffered(buffer_count=1)),
                pl.BlockSpec((3, H), lambda i: (0, 0),            # packed bias/gamma/beta
                             pipeline_mode=pl.Buffered(buffer_count=1)),
            ],
            out_specs=pl.BlockSpec((tm, H), lambda i: (i, 0)),
        ),
        compiler_params=pltpu.CompilerParams(
            dimension_semantics=("parallel",),
            vmem_limit_bytes=vmem_limit,
        ),
        cost_estimate=cost,
    )(x2, weight, params)

    return out[:M].reshape(B, S, H)


def _reference(x, weight, bias, gamma, beta, eps=1e-12):
    y = jnp.einsum("bsh,hk->bsk", x.astype(jnp.float32), weight.astype(jnp.float32)) + bias
    y = jnp.maximum(y, 0.0)
    mean = jnp.mean(y, axis=-1, keepdims=True)
    var = jnp.mean((y - mean) ** 2, axis=-1, keepdims=True)
    return ((y - mean) * jax.lax.rsqrt(var + eps)) * gamma + beta


if __name__ == "__main__":
    batch, seq, hidden = 2, 8, 128
    eps = 1e-12

    key = jax.random.PRNGKey(0)
    kx, kw, kb, kg, kbeta = jax.random.split(key, 5)

    x = jax.random.normal(kx, (batch, seq, hidden), dtype=jnp.float32)
    # Deterministic synthetic parameters (nn.Linear(H, H), nn.LayerNorm(H)).
    weight = jax.random.normal(kw, (hidden, hidden), dtype=jnp.float32) * 0.02
    bias = jax.random.normal(kb, (hidden,), dtype=jnp.float32) * 0.02
    gamma = 1.0 + 0.1 * jax.random.normal(kg, (hidden,), dtype=jnp.float32)
    beta = 0.1 * jax.random.normal(kbeta, (hidden,), dtype=jnp.float32)

    out = bert_prediction_head_transform(x, weight, bias, gamma, beta, eps=eps)
    out = jax.block_until_ready(out)

    ref = _reference(x, weight, bias, gamma, beta, eps=eps)
    assert out.shape == (batch, seq, hidden)
    assert jnp.allclose(out, ref.astype(out.dtype), atol=1e-4, rtol=1e-4)

    print("KERNEL_OK")
</pallas_src>

<mosaic_0001>
module attributes {stable_mosaic.version = 11 : i64} {
  func.func @kernel(%arg0: i32, %arg1: memref<8x128xf32, #tpu.memory_space<vmem>>, %arg2: memref<128x128xf32, #tpu.memory_space<vmem>>, %arg3: memref<3x128xf32, #tpu.memory_space<vmem>>, %arg4: memref<8x128xf32, #tpu.memory_space<vmem>>) attributes {dimension_semantics = [#tpu.dimension_semantics<parallel>], iteration_bounds = array<i64: 2>, scalar_prefetch = 0 : i64, scratch_operands = 0 : i64, tpu.core_type = #tpu.core_type<tc>, window_params = [{transform_indices = @transform_0, window_bounds = array<i64: 8, 128>}, {pipeline_mode = #tpu.pipeline_mode<synchronous>, transform_indices = @transform_1, window_bounds = array<i64: 128, 128>}, {pipeline_mode = #tpu.pipeline_mode<synchronous>, transform_indices = @transform_2, window_bounds = array<i64: 3, 128>}, {transform_indices = @transform_3, window_bounds = array<i64: 8, 128>}]} {
    %c0 = arith.constant 0 : index
    %c0_0 = arith.constant 0 : index
    %0 = vector.load %arg1[%c0, %c0_0] : memref<8x128xf32, #tpu.memory_space<vmem>>, vector<8x128xf32>
    %c0_1 = arith.constant 0 : index
    %c0_2 = arith.constant 0 : index
    %1 = vector.load %arg2[%c0_1, %c0_2] : memref<128x128xf32, #tpu.memory_space<vmem>>, vector<128x128xf32>
    %cst = arith.constant dense<0.000000e+00> : vector<8x128xf32>
    %2 = tpu.matmul %0, %1, %cst {dimension_numbers = #tpu.dot_dimension_numbers<[1], [0], [0], [1], [0, 0, 1, 1], [], []>} : vector<8x128xf32>, vector<128x128xf32>, vector<8x128xf32> -> vector<8x128xf32>
    %c0_3 = arith.constant 0 : index
    %c0_4 = arith.constant 0 : index
    %3 = vector.load %arg3[%c0_3, %c0_4] : memref<3x128xf32, #tpu.memory_space<vmem>>, vector<3x128xf32>
    %4 = vector.extract_strided_slice %3 {offsets = [0, 0], sizes = [1, 128], strides = [1, 1]} : vector<3x128xf32> to vector<1x128xf32>
    %5 = vector.extract_strided_slice %3 {offsets = [1, 0], sizes = [1, 128], strides = [1, 1]} : vector<3x128xf32> to vector<1x128xf32>
    %6 = vector.extract_strided_slice %3 {offsets = [2, 0], sizes = [1, 128], strides = [1, 1]} : vector<3x128xf32> to vector<1x128xf32>
    %7 = vector.broadcast %4 : vector<1x128xf32> to vector<8x128xf32>
    %8 = arith.addf %2, %7 : vector<8x128xf32>
    %cst_5 = arith.constant 0.000000e+00 : f32
    %9 = vector.broadcast %cst_5 : f32 to vector<8x128xf32>
    %10 = arith.maximumf %8, %9 : vector<8x128xf32>
    %cst_6 = arith.constant dense<0.000000e+00> : vector<8xf32>
    %11 = vector.multi_reduction <add>, %10, %cst_6 [1] : vector<8x128xf32> to vector<8xf32>
    %12 = vector.shape_cast %11 : vector<8xf32> to vector<8x1xf32>
    %13 = arith.mulf %10, %10 : vector<8x128xf32>
    %cst_7 = arith.constant dense<0.000000e+00> : vector<8xf32>
    %14 = vector.multi_reduction <add>, %13, %cst_7 [1] : vector<8x128xf32> to vector<8xf32>
    %15 = vector.shape_cast %14 : vector<8xf32> to vector<8x1xf32>
    %cst_8 = arith.constant 7.812500e-03 : f32
    %16 = vector.broadcast %cst_8 : f32 to vector<8x1xf32>
    %17 = arith.mulf %12, %16 : vector<8x1xf32>
    %cst_9 = arith.constant 7.812500e-03 : f32
    %18 = vector.broadcast %cst_9 : f32 to vector<8x1xf32>
    %19 = arith.mulf %15, %18 : vector<8x1xf32>
    %20 = arith.mulf %17, %17 : vector<8x1xf32>
    %21 = arith.subf %19, %20 : vector<8x1xf32>
    %cst_10 = arith.constant 0.000000e+00 : f32
    %22 = vector.broadcast %cst_10 : f32 to vector<8x1xf32>
    %23 = arith.maximumf %21, %22 : vector<8x1xf32>
    %cst_11 = arith.constant 9.99999996E-13 : f32
    %24 = vector.broadcast %cst_11 : f32 to vector<8x1xf32>
    %25 = arith.addf %23, %24 : vector<8x1xf32>
    %26 = math.rsqrt %25 : vector<8x1xf32>
    %27 = vector.broadcast %17 : vector<8x1xf32> to vector<8x128xf32>
    %28 = arith.subf %10, %27 : vector<8x128xf32>
    %29 = vector.broadcast %26 : vector<8x1xf32> to vector<8x128xf32>
    %30 = arith.mulf %28, %29 : vector<8x128xf32>
    %31 = vector.broadcast %5 : vector<1x128xf32> to vector<8x128xf32>
    %32 = arith.mulf %30, %31 : vector<8x128xf32>
    %33 = vector.broadcast %6 : vector<1x128xf32> to vector<8x128xf32>
    %34 = arith.addf %32, %33 : vector<8x128xf32>
    %c0_12 = arith.constant 0 : index
    %c0_13 = arith.constant 0 : index
    %35 = vector.load %arg4[%c0_12, %c0_13] : memref<8x128xf32, #tpu.memory_space<vmem>>, vector<8x128xf32>
    tpu.vector_store %arg4[%c0_12, %c0_13], %34 {strides = array<i32>} : memref<8x128xf32, #tpu.memory_space<vmem>>, vector<8x128xf32>,
    return
  }
  func.func @transform_0(%arg0: i32) -> (i32, i32) {
    %c0_i32 = arith.constant 0 : i32
    %c0_i32_0 = arith.constant 0 : i32
    return %arg0, %c0_i32 : i32, i32
  }
  func.func @transform_1(%arg0: i32) -> (i32, i32) {
    %c0_i32 = arith.constant 0 : i32
    %c0_i32_0 = arith.constant 0 : i32
    %c0_i32_1 = arith.constant 0 : i32
    return %c0_i32, %c0_i32_0 : i32, i32
  }
  func.func @transform_2(%arg0: i32) -> (i32, i32) {
    %c0_i32 = arith.constant 0 : i32
    %c0_i32_0 = arith.constant 0 : i32
    %c0_i32_1 = arith.constant 0 : i32
    return %c0_i32, %c0_i32_0 : i32, i32
  }
  func.func @transform_3(%arg0: i32) -> (i32, i32) {
    %c0_i32 = arith.constant 0 : i32
    %c0_i32_0 = arith.constant 0 : i32
    return %arg0, %c0_i32 : i32, i32
  }
}

</mosaic_0001>

<llo_original>
// kernel: tpu_custom_call.1
$region0: #{tpu_custom_call.1}
  #allocation0 [shape = 'u32[]', space=smem, size = 0x4, offset = 0x4, fixed_abs, tag = 'smem constant byte address 0x4 - core index']
  #allocation1 [shape = 'u32[144,128]{1,0:T(1,128)}', space=vmem, size = 0x12000, scoped, tag = 'internal scratch']
  %s0 = inlined_call_operand.hbm [shape: f32[16,128], index: 0, kind: input, shape index: {}]
  %s1 = inlined_call_operand.hbm [shape: f32[128,128], index: 1, kind: input, shape index: {}]
  %s2 = inlined_call_operand.vmem [shape: f32[3,128], index: 2, kind: input, shape index: {}]
  %s3 = inlined_call_operand.hbm [shape: f32[16,128], index: 3, kind: output, shape index: {}]
  %s4 = sld [smem:[#allocation0]]
  $region53: #{tpu_custom_call.1} parent=0
    _
  %s6 = ssub.s32 1, %s4
  %s7 = scalar_select 0, %s6, %s4
  $region1: #{tpu_custom_call.1} parent=0
    #allocation2 [shape = 'u8[8192]{0}', space=vmem, size = 0x2000, scoped, tag = 'input window, operand 0']
    #allocation3 [shape = 's32[2]{0}', space=sflag, size = 0x8, scoped, tag = 'scoped memory for tpu_custom_call.1']
    #allocation4 [shape = 's32[2]{0}', space=sflag, size = 0x8, scoped, tag = 'scoped memory for tpu_custom_call.1']
    #allocation5 [shape = 'u8[65536]{0}', space=vmem, size = 0x10000, scoped, tag = 'input window, operand 1, single buffered']
    #allocation6 [shape = 's32[1]{0}', space=sflag, size = 0x4, scoped, tag = 'scoped memory for tpu_custom_call.1']
    #allocation7 [shape = 'u8[8192]{0}', space=vmem, size = 0x2000, scoped, tag = 'output window, operand 0']
    %8 = vsyncpa [#allocation3], 0
    %s9 = scalar_lea.sflag [#allocation3], 1
    %10 = vsyncpa %s9, 0
    %11 = vsyncpa [#allocation6], 0
    %12 = vsyncpa [#allocation4], 0
    %s13 = scalar_lea.sflag [#allocation4], 1
    %14 = vsyncpa %s13, 0
    loop: start=0, step=1, limit=4
    $region2: #{tpu_custom_call.1} parent=1 // loop_pre_header
      _
    $region3: #{tpu_custom_call.1} parent=1 // loop_header
      %s16 = sphi 0, %s20
      %p17 = scmp.ge.s32.totalorder %s16, 4
      %s26 = sphi 0, %s28
      %s29 = sphi 0, %s26
      %s30 = sphi 0, %s29
      %s46 = sphi 0, %s30
      %s50 = sphi 0, %s50
      %s52 = sphi 0, %s50
      %s53 = sphi 0, %s52
      %s67 = sphi 0, %s53
      %s71 = sphi 0, %s71
      %s73 = sphi 0, %s71
      %s74 = sphi 0, %s73
      %s88 = sphi 0, %s74
      %s94 = sphi 0, %s96
      %s97 = sphi 0, %s94
      %s98 = sphi 0, %s97
      %s114 = sphi 0, %s98
    $region4: #{tpu_custom_call.1} parent=1 // loop_header_branch
      %19 = sbr.rel (%p17) target = $region8
    $region5: #{tpu_custom_call.1} parent=1 // loop_body
      %s21 = ssub.s32 %s16, 1
      %s22 = ssub.s32 %s16, 2
      %s23 = sadd.s32 %s16, 1
      %s24 = ssub.s32 %s16, %s23
      %p25 = scmp.eq.s32.totalorder %s24, 0
      %s27 = sadd.s32 %s26, 1
      %s28 = scalar_select %p25, %s26, %s27
      %p31 = pneg %p25
      %p32 = scmp.eq.s32.totalorder %s16, 1
      %p33 = por %p31, %p32
      %p34 = scmp.ne.s32.totalorder %s26, %s29
      %p35 = scmp.eq.s32.totalorder %s16, 0
      %p36 = por %p34, %p35
      %p37 = scmp.ne.s32.totalorder %s26, %s29
      %p38 = scmp.eq.s32.totalorder %s21, 1
      %p39 = por %p37, %p38
      %p40 = scmp.ne.s32.totalorder %s29, %s30
      %p41 = scmp.eq.s32.totalorder %s21, 0
      %p42 = por %p40, %p41
      %p43 = scmp.ne.s32.totalorder %s29, %s30
      %p44 = scmp.eq.s32.totalorder %s22, 1
      %p45 = por %p43, %p44
      %p47 = scmp.ne.s32.totalorder %s30, %s46
      %p48 = scmp.eq.s32.totalorder %s22, 0
      %p49 = por %p47, %p48
      %s51 = sadd.s32 %s50, 1
      %p54 = scmp.eq.s32.totalorder %s16, 1
      %p55 = scmp.ne.s32.totalorder %s50, %s52
      %p56 = scmp.eq.s32.totalorder %s16, 0
      %p57 = por %p55, %p56
      %p58 = scmp.ne.s32.totalorder %s50, %s52
      %p59 = scmp.eq.s32.totalorder %s21, 1
      %p60 = por %p58, %p59
      %p61 = scmp.ne.s32.totalorder %s52, %s53
      %p62 = scmp.eq.s32.totalorder %s21, 0
      %p63 = por %p61, %p62
      %p64 = scmp.ne.s32.totalorder %s52, %s53
      %p65 = scmp.eq.s32.totalorder %s22, 1
      %p66 = por %p64, %p65
      %p68 = scmp.ne.s32.totalorder %s53, %s67
      %p69 = scmp.eq.s32.totalorder %s22, 0
      %p70 = por %p68, %p69
      %s72 = sadd.s32 %s71, 1
      %p75 = scmp.eq.s32.totalorder %s16, 1
      %p76 = scmp.ne.s32.totalorder %s71, %s73
      %p77 = scmp.eq.s32.totalorder %s16, 0
      %p78 = por %p76, %p77
      %p79 = scmp.ne.s32.totalorder %s71, %s73
      %p80 = scmp.eq.s32.totalorder %s21, 1
      %p81 = por %p79, %p80
      %p82 = scmp.ne.s32.totalorder %s73, %s74
      %p83 = scmp.eq.s32.totalorder %s21, 0
      %p84 = por %p82, %p83
      %p85 = scmp.ne.s32.totalorder %s73, %s74
      %p86 = scmp.eq.s32.totalorder %s22, 1
      %p87 = por %p85, %p86
      %p89 = scmp.ne.s32.totalorder %s74, %s88
      %p90 = scmp.eq.s32.totalorder %s22, 0
      %p91 = por %p89, %p90
      %s92 = ssub.s32 %s16, %s23
      %p93 = scmp.eq.s32.totalorder %s92, 0
      %s95 = sadd.s32 %s94, 1
      %s96 = scalar_select %p93, %s94, %s95
      %p99 = pneg %p93
      %p100 = scmp.eq.s32.totalorder %s16, 1
      %p101 = por %p99, %p100
      %p102 = scmp.ne.s32.totalorder %s94, %s97
      %p103 = scmp.eq.s32.totalorder %s16, 0
      %p104 = por %p102, %p103
      %p105 = scmp.ne.s32.totalorder %s94, %s97
      %p106 = scmp.eq.s32.totalorder %s21, 1
      %p107 = por %p105, %p106
      %p108 = scmp.ne.s32.totalorder %s97, %s98
      %p109 = scmp.eq.s32.totalorder %s21, 0
      %p110 = por %p108, %p109
      %p111 = scmp.ne.s32.totalorder %s97, %s98
      %p112 = scmp.eq.s32.totalorder %s22, 1
      %p113 = por %p111, %p112
      %p115 = scmp.ne.s32.totalorder %s98, %s114
      %p116 = scmp.eq.s32.totalorder %s22, 0
      %p117 = por %p115, %p116
      %p118 = scmp.le.s32.totalorder 1, %s16
      %p119 = scmp.lt.s32.totalorder %s16, 3
      %p120 = pnand %p118, %p119
      %p121 = pneg %p120
      // Predicated region
      $region9: #{tpu_custom_call.1} parent=5 // pred_check
        _
      $region10: #{tpu_custom_call.1} parent=5 // pred_check_branch
        %123 = sbr.rel (%p120) target = $region12
      $region11: #{tpu_custom_call.1} parent=5 // pred_region
        %s124 = ssub.s32 %s16, 1
        // Predicated region
        $region13: #{tpu_custom_call.1} parent=11 // pred_check
          %p125 = pneg %p63
        $region14: #{tpu_custom_call.1} parent=11 // pred_check_branch
          %127 = sbr.rel (%p125) target = $region16
        $region15: #{tpu_custom_call.1} parent=11 // pred_region
          %s129 = ssub.s32 2048, 2048
          %130 = vsyncadd [#allocation6], %s129
          %s131 = sshll.u32 [#allocation5], 4
          %s132 = int_to_ptr.vmem [resolvable:$true] %s131
          %137 = dma.hbm_to_vmem [thread:$0]  %s1, 2048, %s132, [#allocation6], 128, 128, 8
        $region16: #{tpu_custom_call.1} parent=11 // pred_fallthru
          _
        // Predicated region
        $region17: #{tpu_custom_call.1} parent=11 // pred_check
          %p138 = pneg %p84
        $region18: #{tpu_custom_call.1} parent=11 // pred_check_branch
          %140 = sbr.rel (%p138) target = $region20
        $region19: #{tpu_custom_call.1} parent=11 // pred_region
          _
        $region20: #{tpu_custom_call.1} parent=11 // pred_fallthru
          _
      $region12: #{tpu_custom_call.1} parent=5 // pred_fallthru
        _
      %p141 = scmp.lt.s32.totalorder %s16, 2
      // Predicated region
      $region21: #{tpu_custom_call.1} parent=5 // pred_check
        %p142 = pneg %p141
      $region22: #{tpu_custom_call.1} parent=5 // pred_check_branch
        %144 = sbr.rel (%p142) target = $region24
      $region23: #{tpu_custom_call.1} parent=5 // pred_region
        // Predicated region
        $region25: #{tpu_custom_call.1} parent=23 // pred_check
          %p145 = pneg %p36
        $region26: #{tpu_custom_call.1} parent=23 // pred_check_branch
          %147 = sbr.rel (%p145) target = $region28
        $region27: #{tpu_custom_call.1} parent=23 // pred_region
          %s148 = sand.u32 %s26, 1
          %s149 = scalar_lea.sflag [#allocation3], %s148
          %s150 = sand.u32 %s26, 1
          %s151 = smul.addr %s150, 8
          %s152 = scalar_lea.vmem [#allocation2], %s151
          %s154 = ssub.s32 128, 128
          %155 = vsyncadd %s149, %s154
          %s156 = smul.addr %s16, 128
          %s157 = scalar_lea.hbm %s0, %s156
          %s159 = sshll.u32 %s152, 4
          %s160 = int_to_ptr.vmem [resolvable:$true] %s159
          %162 = dma.hbm_to_vmem [thread:$0]  %s157, 128, %s160, %s149
        $region28: #{tpu_custom_call.1} parent=23 // pred_fallthru
          _
      $region24: #{tpu_custom_call.1} parent=5 // pred_fallthru
        _
      %p163 = scmp.le.s32.totalorder 1, %s16
      %p164 = scmp.lt.s32.totalorder %s16, 3
      %p165 = pnand %p163, %p164
      %p166 = pneg %p165
      // Predicated region
      $region29: #{tpu_custom_call.1} parent=5 // pred_check
        _
      $region30: #{tpu_custom_call.1} parent=5 // pred_check_branch
        %168 = sbr.rel (%p165) target = $region32
      $region31: #{tpu_custom_call.1} parent=5 // pred_region
        %s169 = ssub.s32 %s16, 1
        %s170 = sand.u32 %s29, 1
        %s171 = scalar_lea.sflag [#allocation3], %s170
        %s172 = sand.u32 %s29, 1
        %s173 = smul.addr %s172, 8
        %s174 = scalar_lea.vmem [#allocation2], %s173
        // Predicated region
        $region33: #{tpu_custom_call.1} parent=31 // pred_check
          %p175 = pneg %p42
        $region34: #{tpu_custom_call.1} parent=31 // pred_check_branch
          %177 = sbr.rel (%p175) target = $region36
        $region35: #{tpu_custom_call.1} parent=31 // pred_region
          %178 = dma.done %s171, 128
        $region36: #{tpu_custom_call.1} parent=31 // pred_fallthru
          _
        // Predicated region
        $region37: #{tpu_custom_call.1} parent=31 // pred_check
          %p179 = pneg %p63
        $region38: #{tpu_custom_call.1} parent=31 // pred_check_branch
          %181 = sbr.rel (%p179) target = $region40
        $region39: #{tpu_custom_call.1} parent=31 // pred_region
          %182 = dma.done [#allocation6], 2048
        $region40: #{tpu_custom_call.1} parent=31 // pred_fallthru
          _
        %s183 = sand.u32 %s29, 1
        %s184 = scalar_lea.sflag [#allocation3], %s183
        %s185 = sand.u32 %s29, 1
        %s186 = smul.addr %s185, 8
        %s187 = scalar_lea.vmem [#allocation2], %s186
        %p188 = pneg %p42
        %p189 = pneg %p39
        %p190 = pneg %p63
        %p191 = pneg %p60
        %p192 = pneg %p84
        %p193 = pneg %p81
        %p194 = pneg %p110
        %p195 = pneg %p107
        %s196 = sand.u32 %s97, 1
        %s197 = scalar_lea.sflag [#allocation4], %s196
        %s198 = sand.u32 %s97, 1
        %s199 = smul.addr %s198, 8
        %s200 = scalar_lea.vmem [#allocation7], %s199
        %v201 = vld [vmem:[%s174] sm:$0xff]
        %v202 = vld [vmem:[#allocation5] sm:$0xff]
        %v203 = vld [vmem:[#allocation5 + $0x8] sm:$0xff]
        %v204 = vld [vmem:[#allocation5 + $0x10] sm:$0xff]
        %v205 = vld [vmem:[#allocation5 + $0x18] sm:$0xff]
        %v206 = vld [vmem:[#allocation5 + $0x20] sm:$0xff]
        %v207 = vld [vmem:[#allocation5 + $0x28] sm:$0xff]
        %v208 = vld [vmem:[#allocation5 + $0x30] sm:$0xff]
        %v209 = vld [vmem:[#allocation5 + $0x38] sm:$0xff]
        %v210 = vld [vmem:[#allocation5 + $0x40] sm:$0xff]
        %v211 = vld [vmem:[#allocation5 + $0x48] sm:$0xff]
        %v212 = vld [vmem:[#allocation5 + $0x50] sm:$0xff]
        %v213 = vld [vmem:[#allocation5 + $0x58] sm:$0xff]
        %v214 = vld [vmem:[#allocation5 + $0x60] sm:$0xff]
        %v215 = vld [vmem:[#allocation5 + $0x68] sm:$0xff]
        %v216 = vld [vmem:[#allocation5 + $0x70] sm:$0xff]
        %v217 = vld [vmem:[#allocation5 + $0x78] sm:$0xff]
        %v218 = vld [vmem:[%s2] sm:$0x7]
        %v219 = vlaneseq
        %v220 = vshrl.u32 %v219, 7
        %v221 = vsub.s32 0, %v220
        %v222 = vrot.slane %v218, %v221
        %223 = vmatprep.subr.mxu0 0.0
        %224 = vmatpush1.msra.mxu0 %v202
        %225 = vmatprep.subr.mxu0 0.0
        %226 = vmatpush1.msra.mxu0 %v203
        %227 = vmatprep.subr.mxu0 0.0
        %228 = vmatpush1.msra.mxu0 %v204
        %229 = vmatprep.subr.mxu0 0.0
        %230 = vmatpush1.msra.mxu0 %v205
        %231 = vmatprep.subr.mxu0 0.0
        %232 = vmatpush1.msra.mxu0 %v206
        %233 = vmatprep.subr.mxu0 0.0
        %234 = vmatpush1.msra.mxu0 %v207
        %235 = vmatprep.subr.mxu0 0.0
        %236 = vmatpush1.msra.mxu0 %v208
        %237 = vmatprep.subr.mxu0 0.0
        %238 = vmatpush1.msra.mxu0 %v209
        %239 = vmatprep.subr.mxu0 0.0
        %240 = vmatpush1.msra.mxu0 %v210
        %241 = vmatprep.subr.mxu0 0.0
        %242 = vmatpush1.msra.mxu0 %v211
        %243 = vmatprep.subr.mxu0 0.0
        %244 = vmatpush1.msra.mxu0 %v212
        %245 = vmatprep.subr.mxu0 0.0
        %246 = vmatpush1.msra.mxu0 %v213
        %247 = vmatprep.subr.mxu0 0.0
        %248 = vmatpush1.msra.mxu0 %v214
        %249 = vmatprep.subr.mxu0 0.0
        %250 = vmatpush1.msra.mxu0 %v215
        %251 = vmatprep.subr.mxu0 0.0
        %252 = vmatpush1.msra.mxu0 %v216
        %253 = vmatprep.subr.mxu0 0.0
        %254 = vmatpush1.msra.mxu0 %v217
        %255 = vmatprep.subr.mxu0 0.0
        %256 = vmatpush1.msra.mxu0 0.0
        %257 = vmatprep.subr.mxu0 0.0
        %258 = vmatpush1.msra.mxu0 0.0
        %259 = vmatprep.subr.mxu0 0.0
        %260 = vmatpush1.msra.mxu0 0.0
        %261 = vmatprep.subr.mxu0 0.0
        %262 = vmatpush1.msra.mxu0 0.0
        %263 = vmatprep.subr.mxu0 0.0
        %264 = vmatpush1.msra.mxu0 0.0
        %265 = vmatprep.subr.mxu0 0.0
        %266 = vmatpush1.msra.mxu0 0.0
        %267 = vmatprep.subr.mxu0 0.0
        %268 = vmatpush1.msra.mxu0 0.0
        %269 = vmatprep.subr.mxu0 0.0
        %270 = vmatpush1.msra.mxu0 0.0
        %271 = vmatprep.subr.mxu0 0.0
        %272 = vmatpush1.msra.mxu0 0.0
        %273 = vmatprep.subr.mxu0 0.0
        %274 = vmatpush1.msra.mxu0 0.0
        %275 = vmatprep.subr.mxu0 0.0
        %276 = vmatpush1.msra.mxu0 0.0
        %277 = vmatprep.subr.mxu0 0.0
        %278 = vmatpush1.msra.mxu0 0.0
        %279 = vmatprep.subr.mxu0 0.0
        %280 = vmatpush1.msra.mxu0 0.0
        %281 = vmatprep.subr.mxu0 0.0
        %282 = vmatpush1.msra.mxu0 0.0
        %283 = vmatprep.subr.mxu0 0.0
        %284 = vmatpush1.msra.mxu0 0.0
        %285 = vmatprep.subr.mxu0 0.0
        %286 = vmatpush1.msra.mxu0 0.0
        %287 = vmatprep.mubr.f32.mxu0 0.0
        %288 = vmatmul.mubr.f32.gmra.mrb[0].mxu0 %v201
        %v289 = vpop.f32.mrb[0].mxu0
        %v290 = vadd.f32 %v222, %v289
        %v291 = vpop.f32.mrb[0].mxu0
        %292 = vdwg.mxu0
        %v293 = vmax.f32 %v290, 0.0
        %294 = vadd.xlane.f32.xlu0 %v293
        %v295 = vpop.xlane.xlu0 %294
        %v296 = vmul.f32 %v293, %v293
        %297 = vadd.xlane.f32.xlu0 %v296
        %v298 = vpop.xlane.xlu0 %297
        %v299 = vmul.f32 %v295, 0.0078125
        %v300 = vmul.f32 %v298, 0.0078125
        %v301 = vmul.f32 %v299, %v299
        %v302 = vsub.f32 %v300, %v301
        %v303 = vmax.f32 %v302, 0.0
        %v304 = vadd.f32 %v303, 1e-12
        %v305 = vrsqrt.pop %v304
        %v306 = vsub.f32 %v293, %v299
        %v307 = vmul.f32 %v306, %v305
        %v308 = vlaneseq
        %v309 = vshrl.u32 %v308, 7
        %v310 = vsub.s32 1, %v309
        %v311 = vrot.slane %v218, %v310
        %v312 = vmul.f32 %v307, %v311
        %v313 = vlaneseq
        %v314 = vshrl.u32 %v313, 7
        %v315 = vsub.s32 2, %v314
        %v316 = vrot.slane %v218, %v315
        %v317 = vadd.f32 %v312, %v316
        %318 = vst [vmem:[%s200] sm:$0xff] %v317
        %s319 = sand.u32 %s97, 1
        %s320 = scalar_lea.sflag [#allocation4], %s319
        %s321 = sand.u32 %s97, 1
        %s322 = smul.addr %s321, 8
        %s323 = scalar_lea.vmem [#allocation7], %s322
        // Predicated region
        $region41: #{tpu_custom_call.1} parent=31 // pred_check
          %p324 = pneg %p107
        $region42: #{tpu_custom_call.1} parent=31 // pred_check_branch
          %326 = sbr.rel (%p324) target = $region44
        $region43: #{tpu_custom_call.1} parent=31 // pred_region
          %s328 = ssub.s32 128, 128
          %329 = vsyncadd %s320, %s328
          %s330 = smul.addr %s21, 128
          %s331 = scalar_lea.hbm %s3, %s330
          %s333 = sshll.u32 %s323, 4
          %s334 = int_to_ptr.vmem [resolvable:$true] %s333
          %336 = dma.vmem_to_hbm [thread:$0]  %s334, 128, %s331, %s320
        $region44: #{tpu_custom_call.1} parent=31 // pred_fallthru
          _
      $region32: #{tpu_custom_call.1} parent=5 // pred_fallthru
        _
      %p337 = scmp.le.s32.totalorder 2, %s16
      // Predicated region
      $region45: #{tpu_custom_call.1} parent=5 // pred_check
        %p338 = pneg %p337
      $region46: #{tpu_custom_call.1} parent=5 // pred_check_branch
        %340 = sbr.rel (%p338) target = $region48
      $region47: #{tpu_custom_call.1} parent=5 // pred_region
        %s341 = ssub.s32 %s16, 2
        // Predicated region
        $region49: #{tpu_custom_call.1} parent=47 // pred_check
          %p342 = pneg %p113
        $region50: #{tpu_custom_call.1} parent=47 // pred_check_branch
          %344 = sbr.rel (%p342) target = $region52
        $region51: #{tpu_custom_call.1} parent=47 // pred_region
          %s345 = sand.u32 %s98, 1
          %s346 = scalar_lea.sflag [#allocation4], %s345
          %s347 = sand.u32 %s98, 1
          %s348 = smul.addr %s347, 8
          %s349 = scalar_lea.vmem [#allocation7], %s348
          %350 = dma.done %s346, 128
        $region52: #{tpu_custom_call.1} parent=47 // pred_fallthru
          _
      $region48: #{tpu_custom_call.1} parent=5 // pred_fallthru
        _
    $region6: #{tpu_custom_call.1} parent=1 // loop_footer
      %s20 = sadd.s32 1, %s16
    $region7: #{tpu_custom_call.1} parent=1 // loop_footer_branch
      %15 = sbr.rel target = $region3
    $region8: #{tpu_custom_call.1} parent=1 // loop_exit
      _
    %351 = vsyncpa [#allocation3], 1
    %s352 = scalar_lea.sflag [#allocation3], 1
    %353 = vsyncpa %s352, 1
    %354 = vsyncpa [#allocation6], 1
    %355 = vsyncpa [#allocation4], 1
    %s356 = scalar_lea.sflag [#allocation4], 1
    %357 = vsyncpa %s356, 1

</llo_original>
